<compile_context>
chip_gen: v5e
topology: v5e:2x2
jax: 0.10.0
libtpu: 0.0.40
codegen_flags: <defaults>
</compile_context>

<pallas_src>
import jax
import jax.numpy as jnp
from jax.experimental import pallas as pl
from jax.experimental.pallas import tpu as pltpu


def _round_up(n: int, m: int) -> int:
    return ((n + m - 1) // m) * m


def _cdiv(a: int, b: int) -> int:
    return -(-a // b)


def vae_top_kernel(xp_ref, w1_ref, b1_ref, w2_ref, b2_ref, o_ref):
    # Layer 1 (MXU): [tr, p*L] @ [p*L, p*H] -> [tr, p*H].  W1 is block-diagonal,
    # so the p samples packed into each row stay independent.
    h = jnp.dot(xp_ref[...], w1_ref[...], preferred_element_type=jnp.float32)
    h = jnp.maximum(h + b1_ref[...], 0.0)                       # bias + ReLU (VPU)
    # Layer 2 (MXU): block-diagonal [p*H, p] folds the w2 dot and the per-sample
    # reduction into one matmul -> [tr, p] logits (lane-dense epilogue, free
    # filler under the DMA roofline).
    logit = jnp.dot(h, w2_ref[...], preferred_element_type=jnp.float32) + b2_ref[0]
    o_ref[...] = jax.nn.sigmoid(logit)                          # EUP


def simple_vae_top(x, w1, b1, w2, b2, *, block_b: int = 65536):
    """x: [B, latent_dim]; w1: [L, H]; b1: [H]; w2: [H, 1] or [H]; b2: [1].

    Returns sigmoid(relu(x @ w1 + b1) @ w2 + b2).squeeze(), matching PyTorch.
    Pass x as bfloat16 to halve the dominant HBM stream (accumulation stays f32).
    """
    B, L = x.shape
    H = w1.shape[1]
    f32 = jnp.float32

    # Samples packed per lane-row: keeps the x stream lane-dense (p*L == 128
    # when L divides 128) and gives the MXU a real (K=p*L, N=p*H) shape.
    p = max(1, 128 // L) if L <= 128 else 1
    lane_w = p * L

    # ---- tile selection (rows of the packed [R, p*L] view) ----
    rows = _cdiv(B, p)
    # Cap the x tile at ~4 MiB so the double-buffered working set (x + out +
    # weights) stays well under the 32 MiB scoped-VMEM limit everywhere.
    vmem_row_cap = max(8, ((4 << 20) // (lane_w * 4)) // 8 * 8)
    tr_cap = max(8, min(_round_up(_cdiv(block_b, p), 8), vmem_row_cap))
    # Keep >= 4 grid steps when the batch allows it: v7x has 2 TensorCores (a
    # 1-step grid idles one), and multiple steps keep the DMA pipeline full.
    min_steps = 4
    n_steps = max(_cdiv(rows, tr_cap), min(min_steps, _cdiv(rows, 8)), 1)
    tr = _round_up(_cdiv(rows, n_steps), 8)
    r_pad = tr * n_steps
    b_pad = r_pad * p

    # ---- weight plumbing (tiny tensors; fused/negligible under jit) ----
    eye_p = jnp.eye(p, dtype=f32)
    w1_bd = jnp.kron(eye_p, jnp.asarray(w1, f32)).astype(x.dtype)        # [p*L, p*H]
    w2_bd = jnp.kron(eye_p, jnp.reshape(w2, (H, 1)).astype(f32))         # [p*H, p]
    b1_t = jnp.tile(jnp.asarray(b1, f32), p).reshape(1, p * H)           # [1, p*H]
    b2_s = jnp.reshape(b2, (1,)).astype(f32)                             # SMEM scalar

    # ---- x plumbing: single pass over x; pad only when the batch is ragged ----
    xp = x
    if b_pad != B:
        # TODO(synk): this is the one extra copy of x; only taken for ragged batches.
        xp = jnp.pad(xp, ((0, b_pad - B), (0, 0)))
    xp = xp.reshape(r_pad, lane_w)          # free row-major relayout under jit

    out = pl.pallas_call(
        vae_top_kernel,
        out_shape=jax.ShapeDtypeStruct((r_pad, p), jnp.float32),
        grid=(n_steps,),
        in_specs=[
            # x stream: lane-dense [tr, p*L] blocks over the batch axis.
            pl.BlockSpec((tr, lane_w), lambda i: (i, 0)),
            # Weights/biases: constant index maps -> VMEM-resident across steps.
            pl.BlockSpec((lane_w, p * H), lambda i: (0, 0)),
            pl.BlockSpec((1, p * H), lambda i: (0, 0)),
            pl.BlockSpec((p * H, p), lambda i: (0, 0)),
            # Scalar bias lives in SMEM.
            pl.BlockSpec(memory_space=pltpu.MemorySpace.SMEM),
        ],
        out_specs=pl.BlockSpec((tr, p), lambda i: (i, 0)),
        compiler_params=pltpu.CompilerParams(
            dimension_semantics=("parallel",),      # batch blocks shard across TCs
            vmem_limit_bytes=32 * 1024 * 1024,       # safe on v5e/v6e/v7x
        ),
    )(xp, w1_bd, b1_t, w2_bd, b2_s)

    # Unpack [r_pad, p] -> [b_pad] (row-major, matches the x packing), drop pad,
    # and squeeze like PyTorch's `.squeeze()` (0-d if B == 1).
    return jnp.squeeze(out.reshape(b_pad)[:B])


def xavier_uniform(key, fan_in, fan_out, shape):
    bound = jnp.sqrt(6.0 / (fan_in + fan_out))
    return jax.random.uniform(key, shape, dtype=jnp.float32, minval=-bound, maxval=bound)


def init_params(key, latent_dim, hidden_dim=32):
    k1, k2 = jax.random.split(key)
    # PyTorch nn.Linear weight is (out, in); stored transposed (in, out) for x @ W.
    w1 = xavier_uniform(k1, latent_dim, hidden_dim, (latent_dim, hidden_dim))
    b1 = jnp.full((hidden_dim,), 0.01, dtype=jnp.float32)
    w2 = xavier_uniform(k2, hidden_dim, 1, (hidden_dim, 1))
    b2 = jnp.full((1,), 0.01, dtype=jnp.float32)
    return w1, b1, w2, b2


if __name__ == "__main__":
    key = jax.random.PRNGKey(0)
    kx, kp = jax.random.split(key)

    batch = 1000          # ragged vs the tile -> exercises the pad path + a 4-step grid
    latent_dim = 16
    hidden_dim = 32

    x = jax.random.normal(kx, (batch, latent_dim), dtype=jnp.float32)
    w1, b1, w2, b2 = init_params(kp, latent_dim, hidden_dim)

    fwd = jax.jit(simple_vae_top)
    out = jax.block_until_ready(fwd(x, w1, b1, w2, b2))

    # Pure-JAX reference (same math outside Pallas).
    ref = jnp.squeeze(jax.nn.sigmoid(jnp.maximum(x @ w1 + b1, 0.0) @ w2 + b2))
    assert out.shape == (batch,)
    # Tolerance allows for TPU default-precision (bf16-pass) matmul differences
    # between the Pallas and XLA paths; use precision=HIGHEST in both for parity.
    assert jnp.allclose(out, ref, atol=1e-4, rtol=1e-4)

    print("KERNEL_OK")
</pallas_src>

<mosaic_0001>
module attributes {stable_mosaic.version = 11 : i64} {
  func.func @vae_top_kernel(%arg0: i32, %arg1: memref<32x128xf32, #tpu.memory_space<vmem>>, %arg2: memref<128x256xf32, #tpu.memory_space<vmem>>, %arg3: memref<1x256xf32, #tpu.memory_space<vmem>>, %arg4: memref<256x8xf32, #tpu.memory_space<vmem>>, %arg5: memref<1xf32, #tpu.memory_space<smem>>, %arg6: memref<32x8xf32, #tpu.memory_space<vmem>>) attributes {dimension_semantics = [#tpu.dimension_semantics<parallel>], iteration_bounds = array<i64: 4>, scalar_prefetch = 0 : i64, scratch_operands = 0 : i64, tpu.core_type = #tpu.core_type<tc>, window_params = [{transform_indices = @transform_0, window_bounds = array<i64: 32, 128>}, {pipeline_mode = #tpu.pipeline_mode<synchronous>, transform_indices = @transform_1, window_bounds = array<i64: 128, 256>}, {pipeline_mode = #tpu.pipeline_mode<synchronous>, transform_indices = @transform_2, window_bounds = array<i64: 1, 256>}, {pipeline_mode = #tpu.pipeline_mode<synchronous>, transform_indices = @transform_3, window_bounds = array<i64: 256, 8>}, {transform_indices = @transform_4, window_bounds = array<i64: 1>}, {transform_indices = @transform_5, window_bounds = array<i64: 32, 8>}]} {
    %c0 = arith.constant 0 : index
    %c0_0 = arith.constant 0 : index
    %0 = vector.load %arg1[%c0, %c0_0] : memref<32x128xf32, #tpu.memory_space<vmem>>, vector<32x128xf32>
    %c0_1 = arith.constant 0 : index
    %c0_2 = arith.constant 0 : index
    %1 = vector.load %arg2[%c0_1, %c0_2] : memref<128x256xf32, #tpu.memory_space<vmem>>, vector<128x256xf32>
    %cst = arith.constant dense<0.000000e+00> : vector<32x256xf32>
    %2 = tpu.matmul %0, %1, %cst {dimension_numbers = #tpu.dot_dimension_numbers<[1], [0], [0], [1], [0, 0, 1, 1], [], []>} : vector<32x128xf32>, vector<128x256xf32>, vector<32x256xf32> -> vector<32x256xf32>
    %c0_3 = arith.constant 0 : index
    %c0_4 = arith.constant 0 : index
    %3 = vector.load %arg3[%c0_3, %c0_4] : memref<1x256xf32, #tpu.memory_space<vmem>>, vector<1x256xf32>
    %4 = vector.broadcast %3 : vector<1x256xf32> to vector<32x256xf32>
    %5 = arith.addf %2, %4 : vector<32x256xf32>
    %cst_5 = arith.constant 0.000000e+00 : f32
    %6 = vector.broadcast %cst_5 : f32 to vector<32x256xf32>
    %7 = arith.maximumf %5, %6 : vector<32x256xf32>
    %c0_6 = arith.constant 0 : index
    %c0_7 = arith.constant 0 : index
    %8 = vector.load %arg4[%c0_6, %c0_7] : memref<256x8xf32, #tpu.memory_space<vmem>>, vector<256x8xf32>
    %cst_8 = arith.constant dense<0.000000e+00> : vector<32x8xf32>
    %9 = tpu.matmul %7, %8, %cst_8 {dimension_numbers = #tpu.dot_dimension_numbers<[1], [0], [0], [1], [0, 0, 1, 1], [], []>} : vector<32x256xf32>, vector<256x8xf32>, vector<32x8xf32> -> vector<32x8xf32>
    %c0_9 = arith.constant 0 : index
    %10 = memref.load %arg5[%c0_9] : memref<1xf32, #tpu.memory_space<smem>>
    %11 = vector.broadcast %10 : f32 to vector<32x8xf32>
    %12 = arith.addf %9, %11 : vector<32x8xf32>
    %13 = arith.negf %12 : vector<32x8xf32>
    %14 = math.exp %13 : vector<32x8xf32>
    %cst_10 = arith.constant 1.000000e+00 : f32
    %15 = vector.broadcast %cst_10 : f32 to vector<32x8xf32>
    %16 = arith.addf %15, %14 : vector<32x8xf32>
    %17 = arith.divf %15, %16 : vector<32x8xf32>
    %c0_11 = arith.constant 0 : index
    %c0_12 = arith.constant 0 : index
    %18 = vector.load %arg6[%c0_11, %c0_12] : memref<32x8xf32, #tpu.memory_space<vmem>>, vector<32x8xf32>
    tpu.vector_store %arg6[%c0_11, %c0_12], %17 {strides = array<i32>} : memref<32x8xf32, #tpu.memory_space<vmem>>, vector<32x8xf32>,
    return
  }
  func.func @transform_0(%arg0: i32) -> (i32, i32) {
    %c0_i32 = arith.constant 0 : i32
    %c0_i32_0 = arith.constant 0 : i32
    return %arg0, %c0_i32 : i32, i32
  }
  func.func @transform_1(%arg0: i32) -> (i32, i32) {
    %c0_i32 = arith.constant 0 : i32
    %c0_i32_0 = arith.constant 0 : i32
    %c0_i32_1 = arith.constant 0 : i32
    return %c0_i32, %c0_i32_0 : i32, i32
  }
  func.func @transform_2(%arg0: i32) -> (i32, i32) {
    %c0_i32 = arith.constant 0 : i32
    %c0_i32_0 = arith.constant 0 : i32
    %c0_i32_1 = arith.constant 0 : i32
    return %c0_i32, %c0_i32_0 : i32, i32
  }
  func.func @transform_3(%arg0: i32) -> (i32, i32) {
    %c0_i32 = arith.constant 0 : i32
    %c0_i32_0 = arith.constant 0 : i32
    %c0_i32_1 = arith.constant 0 : i32
    return %c0_i32, %c0_i32_0 : i32, i32
  }
  func.func @transform_4(%arg0: i32) -> i32 {
    %c0_i32 = arith.constant 0 : i32
    %c0_i32_0 = arith.constant 0 : i32
    return %c0_i32 : i32
  }
  func.func @transform_5(%arg0: i32) -> (i32, i32) {
    %c0_i32 = arith.constant 0 : i32
    %c0_i32_0 = arith.constant 0 : i32
    return %arg0, %c0_i32 : i32, i32
  }
}

</mosaic_0001>

<llo_original>
// kernel: tile.8
$region0: #{tile.8}
  #allocation0 [shape = 's32[1]{0}', space=sflag, size = 0x4, scoped, tag = 'scoped memory for tile.8']
  %s0 = inlined_call_operand.vmem [shape: f32[32], index: 0, kind: input, shape index: {}]
  %s1 = inlined_call_operand.vmem [shape: f32[8,32], index: 1, kind: output, shape index: {}]
  // Predicated region
  $region2: #{tile.8} parent=0 // pred_check
    _
  $region3: #{tile.8} parent=0 // pred_check_branch
    %3 = sbr.rel (0) target = $region5
  $region4: #{tile.8} parent=0 // pred_region
    _
  $region5: #{tile.8} parent=0 // pred_fallthru
    _
  %v4 = vld [vmem:[%s0] ss:$0 sm:$0xff]
  %5 = vst [vmem:[%s1] sm:$0xff] %v4

// kernel: tile.9
$region0: #{tile.9}
  %s0 = inlined_call_operand.vmem [shape: f32[8,32], index: 0, kind: input, shape index: {}]
  %s1 = inlined_call_operand.vmem [shape: f32[1,256], index: 1, kind: output, shape index: {}]
  $region1: #{tile.9} parent=0
    #allocation0 [shape = 'u8[8192]{0}', space=vmem, size = 0x2000, scoped, tag = 'scoped mem for output reshape']
    %s2 = smov 3
    %v3 = vld [vmem:[%s0] ss:$4 sm:%s2]
    %vm4 = vcmask 261120
    %5 = vst.msk [vmem:[#allocation0] ss:$8 sm:$0x3] %vm4, %v3
    %s6 = scalar_lea.vmem %s0, 3
    %s7 = smov 3
    %v8 = vld [vmem:[%s6] ss:$4 sm:%s7]
    %9 = vrot.lane.b32.xlu0 %v8, 96
    %v10 = vpop.permute.xlu0 %9
    %vm11 = vcmask 1048320
    %12 = vst.msk [vmem:[#allocation0] ss:$8 sm:$0x3] %vm11, %v10
    %s13 = scalar_lea.vmem %s0, 2
    %s14 = smov 3
    %v15 = vld [vmem:[%s13] ss:$4 sm:%s14]
    %16 = vrot.lane.b32.xlu0 %v15, 64
    %v17 = vpop.permute.xlu0 %16
    %vm18 = vcmask 785920
    %19 = vst.msk [vmem:[#allocation0] ss:$8 sm:$0x3] %vm18, %v17
    %s20 = scalar_lea.vmem %s0, 1
    %s21 = smov 3
    %v22 = vld [vmem:[%s20] ss:$4 sm:%s21]
    %23 = vrot.lane.b32.xlu0 %v22, 32
    %v24 = vpop.permute.xlu0 %23
    %vm25 = vcmask 523520
    %26 = vst.msk [vmem:[#allocation0] ss:$8 sm:$0x3] %vm25, %v24
    %s28 = ssub.s32 2, 1
    %v29 = vld [vmem:[#allocation0] sm:%s28]
    %s31 = ssub.s32 2, 1
    %32 = vst [vmem:[%s1] sm:%s31] %v29
    %s33 = scalar_lea.vmem [#allocation0], 8
    %v34 = vld [vmem:[%s33] sm:%s28]
    %s36 = ssub.s32 2, 1
    %s37 = scalar_lea.vmem %s1, 1
    %38 = vst [vmem:[%s37] sm:%s36] %v34

// kernel: simple_vae_top.1
$region0: #{simple_vae_top.1}
  #allocation0 [shape = 'u32[]', space=smem, size = 0x4, offset = 0x4, fixed_abs, tag = 'smem constant byte address 0x4 - core index']
  #allocation1 [shape = 'u32[72,128]{1,0:T(1,128)}', space=vmem, size = 0x9000, scoped, tag = 'internal scratch']
  #allocation2 [shape = 'f32[1]{0:T(128)S(6)}', space=smem, size = 0x200, scoped, tag = 'scoped memory for simple_vae_top.1']
  %s0 = inlined_call_operand.vmem [shape: f32[128,128], index: 0, kind: input, shape index: {}]
  %s1 = inlined_call_operand.vmem [shape: f32[128,256], index: 1, kind: input, shape index: {}]
  %s2 = inlined_call_operand.vmem [shape: f32[1,256], index: 2, kind: input, shape index: {}]
  %s3 = inlined_call_operand.vmem [shape: f32[256,8], index: 3, kind: input, shape index: {}]
  %s4 = inlined_call_operand.<no memory space> [shape: f32[1], index: 4, kind: input, shape index: {}]
  %s5 = inlined_call_operand.vmem [shape: f32[128,8], index: 5, kind: output, shape index: {}]
  %s6 = sld [smem:[#allocation0]]
  $region53: #{simple_vae_top.1} parent=0
    _
  %s8 = ssub.s32 1, %s6
  %s9 = scalar_select 0, %s8, %s6
  %10 = sst [smem:[#allocation2]] %s4
  loop: start=0, step=1, limit=6
  $region2: #{simple_vae_top.1} parent=0 // loop_pre_header
    _
  $region3: #{simple_vae_top.1} parent=0 // loop_header
    %s12 = sphi 0, %s16
    %p13 = scmp.ge.s32.totalorder %s12, 6
    %s22 = sphi 0, %s24
    %s25 = sphi 0, %s22
    %s26 = sphi 0, %s25
    %s42 = sphi 0, %s26
    %s46 = sphi 0, %s46
    %s48 = sphi 0, %s46
    %s49 = sphi 0, %s48
    %s63 = sphi 0, %s49
    %s67 = sphi 0, %s67
    %s69 = sphi 0, %s67
    %s70 = sphi 0, %s69
    %s84 = sphi 0, %s70
    %s88 = sphi 0, %s88
    %s90 = sphi 0, %s88
    %s91 = sphi 0, %s90
    %s105 = sphi 0, %s91
    %s109 = sphi 0, %s109
    %s111 = sphi 0, %s109
    %s112 = sphi 0, %s111
    %s126 = sphi 0, %s112
    %s132 = sphi 0, %s134
    %s135 = sphi 0, %s132
    %s136 = sphi 0, %s135
    %s152 = sphi 0, %s136
  $region4: #{simple_vae_top.1} parent=0 // loop_header_branch
    %15 = sbr.rel (%p13) target = $region8
  $region5: #{simple_vae_top.1} parent=0 // loop_body
    %s17 = ssub.s32 %s12, 1
    %s18 = ssub.s32 %s12, 2
    %s19 = sadd.s32 %s12, 1
    %s20 = ssub.s32 %s12, %s19
    %p21 = scmp.eq.s32.totalorder %s20, 0
    %s23 = sadd.s32 %s22, 1
    %s24 = scalar_select %p21, %s22, %s23
    %p27 = pneg %p21
    %p28 = scmp.eq.s32.totalorder %s12, 3
    %p29 = por %p27, %p28
    %p30 = scmp.ne.s32.totalorder %s22, %s25
    %p31 = scmp.eq.s32.totalorder %s12, 0
    %p32 = por %p30, %p31
    %p33 = scmp.ne.s32.totalorder %s22, %s25
    %p34 = scmp.eq.s32.totalorder %s17, 3
    %p35 = por %p33, %p34
    %p36 = scmp.ne.s32.totalorder %s25, %s26
    %p37 = scmp.eq.s32.totalorder %s17, 0
    %p38 = por %p36, %p37
    %p39 = scmp.ne.s32.totalorder %s25, %s26
    %p40 = scmp.eq.s32.totalorder %s18, 3
    %p41 = por %p39, %p40
    %p43 = scmp.ne.s32.totalorder %s26, %s42
    %p44 = scmp.eq.s32.totalorder %s18, 0
    %p45 = por %p43, %p44
    %s47 = sadd.s32 %s46, 1
    %p50 = scmp.eq.s32.totalorder %s12, 3
    %p51 = scmp.ne.s32.totalorder %s46, %s48
    %p52 = scmp.eq.s32.totalorder %s12, 0
    %p53 = por %p51, %p52
    %p54 = scmp.ne.s32.totalorder %s46, %s48
    %p55 = scmp.eq.s32.totalorder %s17, 3
    %p56 = por %p54, %p55
    %p57 = scmp.ne.s32.totalorder %s48, %s49
    %p58 = scmp.eq.s32.totalorder %s17, 0
    %p59 = por %p57, %p58
    %p60 = scmp.ne.s32.totalorder %s48, %s49
    %p61 = scmp.eq.s32.totalorder %s18, 3
    %p62 = por %p60, %p61
    %p64 = scmp.ne.s32.totalorder %s49, %s63
    %p65 = scmp.eq.s32.totalorder %s18, 0
    %p66 = por %p64, %p65
    %s68 = sadd.s32 %s67, 1
    %p71 = scmp.eq.s32.totalorder %s12, 3
    %p72 = scmp.ne.s32.totalorder %s67, %s69
    %p73 = scmp.eq.s32.totalorder %s12, 0
    %p74 = por %p72, %p73
    %p75 = scmp.ne.s32.totalorder %s67, %s69
    %p76 = scmp.eq.s32.totalorder %s17, 3
    %p77 = por %p75, %p76
    %p78 = scmp.ne.s32.totalorder %s69, %s70
    %p79 = scmp.eq.s32.totalorder %s17, 0
    %p80 = por %p78, %p79
    %p81 = scmp.ne.s32.totalorder %s69, %s70
    %p82 = scmp.eq.s32.totalorder %s18, 3
    %p83 = por %p81, %p82
    %p85 = scmp.ne.s32.totalorder %s70, %s84
    %p86 = scmp.eq.s32.totalorder %s18, 0
    %p87 = por %p85, %p86
    %s89 = sadd.s32 %s88, 1
    %p92 = scmp.eq.s32.totalorder %s12, 3
    %p93 = scmp.ne.s32.totalorder %s88, %s90
    %p94 = scmp.eq.s32.totalorder %s12, 0
    %p95 = por %p93, %p94
    %p96 = scmp.ne.s32.totalorder %s88, %s90
    %p97 = scmp.eq.s32.totalorder %s17, 3
    %p98 = por %p96, %p97
    %p99 = scmp.ne.s32.totalorder %s90, %s91
    %p100 = scmp.eq.s32.totalorder %s17, 0
    %p101 = por %p99, %p100
    %p102 = scmp.ne.s32.totalorder %s90, %s91
    %p103 = scmp.eq.s32.totalorder %s18, 3
    %p104 = por %p102, %p103
    %p106 = scmp.ne.s32.totalorder %s91, %s105
    %p107 = scmp.eq.s32.totalorder %s18, 0
    %p108 = por %p106, %p107
    %s110 = sadd.s32 %s109, 1
    %p113 = scmp.eq.s32.totalorder %s12, 3
    %p114 = scmp.ne.s32.totalorder %s109, %s111
    %p115 = scmp.eq.s32.totalorder %s12, 0
    %p116 = por %p114, %p115
    %p117 = scmp.ne.s32.totalorder %s109, %s111
    %p118 = scmp.eq.s32.totalorder %s17, 3
    %p119 = por %p117, %p118
    %p120 = scmp.ne.s32.totalorder %s111, %s112
    %p121 = scmp.eq.s32.totalorder %s17, 0
    %p122 = por %p120, %p121
    %p123 = scmp.ne.s32.totalorder %s111, %s112
    %p124 = scmp.eq.s32.totalorder %s18, 3
    %p125 = por %p123, %p124
    %p127 = scmp.ne.s32.totalorder %s112, %s126
    %p128 = scmp.eq.s32.totalorder %s18, 0
    %p129 = por %p127, %p128
    %s130 = ssub.s32 %s12, %s19
    %p131 = scmp.eq.s32.totalorder %s130, 0
    %s133 = sadd.s32 %s132, 1
    %s134 = scalar_select %p131, %s132, %s133
    %p137 = pneg %p131
    %p138 = scmp.eq.s32.totalorder %s12, 3
    %p139 = por %p137, %p138
    %p140 = scmp.ne.s32.totalorder %s132, %s135
    %p141 = scmp.eq.s32.totalorder %s12, 0
    %p142 = por %p140, %p141
    %p143 = scmp.ne.s32.totalorder %s132, %s135
    %p144 = scmp.eq.s32.totalorder %s17, 3
    %p145 = por %p143, %p144
    %p146 = scmp.ne.s32.totalorder %s135, %s136
    %p147 = scmp.eq.s32.totalorder %s17, 0
    %p148 = por %p146, %p147
    %p149 = scmp.ne.s32.totalorder %s135, %s136
    %p150 = scmp.eq.s32.totalorder %s18, 3
    %p151 = por %p149, %p150
    %p153 = scmp.ne.s32.totalorder %s136, %s152
    %p154 = scmp.eq.s32.totalorder %s18, 0
    %p155 = por %p153, %p154
    %p156 = scmp.le.s32.totalorder 1, %s12
    %p157 = scmp.lt.s32.totalorder %s12, 5
    %p158 = pnand %p156, %p157
    %p159 = pneg %p158
    // Predicated region
    $region9: #{simple_vae_top.1} parent=5 // pred_check
      _
    $region10: #{simple_vae_top.1} parent=5 // pred_check_branch
      %161 = sbr.rel (%p158) target = $region12
    $region11: #{simple_vae_top.1} parent=5 // pred_region
      %s162 = ssub.s32 %s12, 1
      // Predicated region
      $region13: #{simple_vae_top.1} parent=11 // pred_check
        %p163 = pneg %p59
      $region14: #{simple_vae_top.1} parent=11 // pred_check_branch
        %165 = sbr.rel (%p163) target = $region16
      $region15: #{simple_vae_top.1} parent=11 // pred_region
        _
      $region16: #{simple_vae_top.1} parent=11 // pred_fallthru
        _
      // Predicated region
      $region17: #{simple_vae_top.1} parent=11 // pred_check
        %p166 = pneg %p80
      $region18: #{simple_vae_top.1} parent=11 // pred_check_branch
        %168 = sbr.rel (%p166) target = $region20
      $region19: #{simple_vae_top.1} parent=11 // pred_region
        _
      $region20: #{simple_vae_top.1} parent=11 // pred_fallthru
        _
      // Predicated region
      $region21: #{simple_vae_top.1} parent=11 // pred_check
        %p169 = pneg %p101
      $region22: #{simple_vae_top.1} parent=11 // pred_check_branch
        %171 = sbr.rel (%p169) target = $region24
      $region23: #{simple_vae_top.1} parent=11 // pred_region
        _
      $region24: #{simple_vae_top.1} parent=11 // pred_fallthru
        _
      // Predicated region
      $region25: #{simple_vae_top.1} parent=11 // pred_check
        %p172 = pneg %p122
      $region26: #{simple_vae_top.1} parent=11 // pred_check_branch
        %174 = sbr.rel (%p172) target = $region28
      $region27: #{simple_vae_top.1} parent=11 // pred_region
        _
      $region28: #{simple_vae_top.1} parent=11 // pred_fallthru
        _
    $region12: #{simple_vae_top.1} parent=5 // pred_fallthru
      _
    %p175 = scmp.lt.s32.totalorder %s12, 4
    // Predicated region
    $region29: #{simple_vae_top.1} parent=5 // pred_check
      %p176 = pneg %p175
    $region30: #{simple_vae_top.1} parent=5 // pred_check_branch
      %178 = sbr.rel (%p176) target = $region32
    $region31: #{simple_vae_top.1} parent=5 // pred_region
      // Predicated region
      $region33: #{simple_vae_top.1} parent=31 // pred_check
        %p179 = pneg %p32
      $region34: #{simple_vae_top.1} parent=31 // pred_check_branch
        %181 = sbr.rel (%p179) target = $region36
      $region35: #{simple_vae_top.1} parent=31 // pred_region
        %s182 = smul.u32 4, %s12
        %p183 = scmp.lt.s32.totalorder %s182, 15
        %s184 = scalar_select %p183, %s182, 15
        %s185 = smul.addr %s184, 8
        %s186 = scalar_lea.vmem %s0, %s185
        %s187 = smul.u32 4, %s12
      $region36: #{simple_vae_top.1} parent=31 // pred_fallthru
        _
    $region32: #{simple_vae_top.1} parent=5 // pred_fallthru
      _
    %p188 = scmp.le.s32.totalorder 1, %s12
    %p189 = scmp.lt.s32.totalorder %s12, 5
    %p190 = pnand %p188, %p189
    %p191 = pneg %p190
    // Predicated region
    $region37: #{simple_vae_top.1} parent=5 // pred_check
      _
    $region38: #{simple_vae_top.1} parent=5 // pred_check_branch
      %193 = sbr.rel (%p190) target = $region40
    $region39: #{simple_vae_top.1} parent=5 // pred_region
      %s194 = ssub.s32 %s12, 1
      %s195 = smul.u32 4, %s17
      %p196 = scmp.lt.s32.totalorder %s195, 15
      %s197 = scalar_select %p196, %s195, 15
      %s198 = smul.addr %s197, 8
      %s199 = scalar_lea.vmem %s0, %s198
      %p200 = pneg %p38
      %p201 = pneg %p35
      %p202 = pneg %p59
      %p203 = pneg %p56
      %p204 = pneg %p80
      %p205 = pneg %p77
      %p206 = pneg %p101
      %p207 = pneg %p98
      %p208 = pneg %p122
      %p209 = pneg %p119
      %p210 = pneg %p148
      %p211 = pneg %p145
      %s212 = smul.u32 4, %s17
      %p213 = scmp.lt.s32.totalorder %s212, 15
      %s214 = scalar_select %p213, %s212, 15
      %s215 = smul.addr %s214, 8
      %s216 = scalar_lea.vmem %s5, %s215
      %s217 = smul.u32 4, %s17
      %p218 = scmp.lt.s32.totalorder %s217, 15
      %s219 = scalar_select %p218, %s217, 15
      %s220 = smul.addr %s219, 8
      %s221 = scalar_lea.vmem %s0, %s220
      %s222 = smul.u32 4, %s17
      %s223 = smul.u32 4, %s17
      %p224 = scmp.lt.s32.totalorder %s223, 15
      %s225 = scalar_select %p224, %s223, 15
      %s226 = smul.addr %s225, 8
      %s227 = scalar_lea.vmem %s5, %s226
      %s228 = smul.u32 4, %s17
      %v229 = vld [vmem:[%s221] sm:$0xff]
      %v230 = vld [vmem:[%s221 + $0x8] sm:$0xff]
      %v231 = vld [vmem:[%s221 + $0x10] sm:$0xff]
      %v232 = vld [vmem:[%s221 + $0x18] sm:$0xff]
      %v233 = vld [vmem:[%s1] sm:$0xff]
      %v234 = vld [vmem:[%s1 + $0x8] sm:$0xff]
      %v235 = vld [vmem:[%s1 + $0x10] sm:$0xff]
      %v236 = vld [vmem:[%s1 + $0x18] sm:$0xff]
      %v237 = vld [vmem:[%s1 + $0x20] sm:$0xff]
      %v238 = vld [vmem:[%s1 + $0x28] sm:$0xff]
      %v239 = vld [vmem:[%s1 + $0x30] sm:$0xff]
      %v240 = vld [vmem:[%s1 + $0x38] sm:$0xff]
      %v241 = vld [vmem:[%s1 + $0x40] sm:$0xff]
      %v242 = vld [vmem:[%s1 + $0x48] sm:$0xff]
      %v243 = vld [vmem:[%s1 + $0x50] sm:$0xff]
      %v244 = vld [vmem:[%s1 + $0x58] sm:$0xff]
      %v245 = vld [vmem:[%s1 + $0x60] sm:$0xff]
      %v246 = vld [vmem:[%s1 + $0x68] sm:$0xff]
      %v247 = vld [vmem:[%s1 + $0x70] sm:$0xff]
      %v248 = vld [vmem:[%s1 + $0x78] sm:$0xff]
      %v249 = vld [vmem:[%s1 + $0x80] sm:$0xff]
      %v250 = vld [vmem:[%s1 + $0x88] sm:$0xff]
      %v251 = vld [vmem:[%s1 + $0x90] sm:$0xff]
      %v252 = vld [vmem:[%s1 + $0x98] sm:$0xff]
      %v253 = vld [vmem:[%s1 + $0xa0] sm:$0xff]
      %v254 = vld [vmem:[%s1 + $0xa8] sm:$0xff]
      %v255 = vld [vmem:[%s1 + $0xb0] sm:$0xff]
      %v256 = vld [vmem:[%s1 + $0xb8] sm:$0xff]
      %v257 = vld [vmem:[%s1 + $0xc0] sm:$0xff]
      %v258 = vld [vmem:[%s1 + $0xc8] sm:$0xff]
      %v259 = vld [vmem:[%s1 + $0xd0] sm:$0xff]
      %v260 = vld [vmem:[%s1 + $0xd8] sm:$0xff]
      %v261 = vld [vmem:[%s1 + $0xe0] sm:$0xff]
      %v262 = vld [vmem:[%s1 + $0xe8] sm:$0xff]
      %v263 = vld [vmem:[%s1 + $0xf0] sm:$0xff]
      %v264 = vld [vmem:[%s1 + $0xf8] sm:$0xff]
      %v265 = vld [vmem:[%s2] sm:$0x3]
      %v267 = vperm.slane %v265, 0
      %v268 = vperm.slane %v265, 1
      %271 = vmatpush.msra.mxu0 %v263
      %272 = vmatpush.msra.mxu0 %v261
      %273 = vmatpush.msra.mxu0 %v259
      %274 = vmatpush.msra.mxu0 %v257
      %275 = vmatpush.msra.mxu0 %v255
      %276 = vmatpush.msra.mxu0 %v253
      %277 = vmatpush.msra.mxu0 %v251
      %278 = vmatpush.msra.mxu0 %v249
      %279 = vmatpush.msra.mxu0 %v247
      %280 = vmatpush.msra.mxu0 %v245
      %281 = vmatpush.msra.mxu0 %v243
      %282 = vmatpush.msra.mxu0 %v241
      %283 = vmatpush.msra.mxu0 %v239
      %284 = vmatpush.msra.mxu0 %v237
      %285 = vmatpush.msra.mxu0 %v235
      %286 = vmatpush.msra.mxu0 %v233
      %287 = vmatmul.f32.gmra.mxu0 %v229
      %v288 = vpop.f32.mrf.mxu0
      %v289 = vadd.f32 %v267, %v288
      %290 = vmatmul.f32.gmra.mxu0 %v230
      %v291 = vpop.f32.mrf.mxu0
      %v292 = vadd.f32 %v267, %v291
      %293 = vmatmul.f32.gmra.mxu0 %v231
      %v294 = vpop.f32.mrf.mxu0
      %v295 = vadd.f32 %v267, %v294
      %296 = vmatmul.f32.gmra.mxu0 %v232
      %v297 = vpop.f32.mrf.mxu0
      %v298 = vadd.f32 %v267, %v297
      %299 = vdwg.mxu0
      %300 = vmatpush.msra.mxu0 %v264
      %301 = vmatpush.msra.mxu0 %v262
      %302 = vmatpush.msra.mxu0 %v260
      %303 = vmatpush.msra.mxu0 %v258
      %304 = vmatpush.msra.mxu0 %v256
      %305 = vmatpush.msra.mxu0 %v254
      %306 = vmatpush.msra.mxu0 %v252
      %307 = vmatpush.msra.mxu0 %v250
      %308 = vmatpush.msra.mxu0 %v248
      %309 = vmatpush.msra.mxu0 %v246
      %310 = vmatpush.msra.mxu0 %v244
      %311 = vmatpush.msra.mxu0 %v242
      %312 = vmatpush.msra.mxu0 %v240
      %313 = vmatpush.msra.mxu0 %v238
      %314 = vmatpush.msra.mxu0 %v236
      %315 = vmatpush.msra.mxu0 %v234
      %316 = vmatmul.f32.gmra.mxu0 %v229
      %v317 = vpop.f32.mrf.mxu0
      %v318 = vadd.f32 %v268, %v317
      %319 = vmatmul.f32.gmra.mxu0 %v230
      %v320 = vpop.f32.mrf.mxu0
      %v321 = vadd.f32 %v268, %v320
      %322 = vmatmul.f32.gmra.mxu0 %v231
      %v323 = vpop.f32.mrf.mxu0
      %v324 = vadd.f32 %v268, %v323
      %325 = vmatmul.f32.gmra.mxu0 %v232
      %v326 = vpop.f32.mrf.mxu0
      %v327 = vadd.f32 %v268, %v326
      %328 = vdwg.mxu0
      %v329 = vmax.f32 %v289, 0.0
      %v330 = vmax.f32 %v318, 0.0
      %v331 = vmax.f32 %v292, 0.0
      %v332 = vmax.f32 %v321, 0.0
      %v333 = vmax.f32 %v295, 0.0
      %v334 = vmax.f32 %v324, 0.0
      %v335 = vmax.f32 %v298, 0.0
      %v336 = vmax.f32 %v327, 0.0
      %v337 = vld [vmem:[%s3] sm:$0xff]
      %v338 = vld [vmem:[%s3 + $0x8] sm:$0xff]
      %v339 = vld [vmem:[%s3 + $0x10] sm:$0xff]
      %v340 = vld [vmem:[%s3 + $0x18] sm:$0xff]
      %v341 = vld [vmem:[%s3 + $0x20] sm:$0xff]
      %v342 = vld [vmem:[%s3 + $0x28] sm:$0xff]
      %v343 = vld [vmem:[%s3 + $0x30] sm:$0xff]
      %v344 = vld [vmem:[%s3 + $0x38] sm:$0xff]
      %v345 = vld [vmem:[%s3 + $0x40] sm:$0xff]
      %v346 = vld [vmem:[%s3 + $0x48] sm:$0xff]
      %v347 = vld [vmem:[%s3 + $0x50] sm:$0xff]
      %v348 = vld [vmem:[%s3 + $0x58] sm:$0xff]
      %v349 = vld [vmem:[%s3 + $0x60] sm:$0xff]
      %v350 = vld [vmem:[%s3 + $0x68] sm:$0xff]
      %v351 = vld [vmem:[%s3 + $0x70] sm:$0xff]
      %v352 = vld [vmem:[%s3 + $0x78] sm:$0xff]
      %v353 = vld [vmem:[%s3 + $0x80] sm:$0xff]
      %v354 = vld [vmem:[%s3 + $0x88] sm:$0xff]
      %v355 = vld [vmem:[%s3 + $0x90] sm:$0xff]
      %v356 = vld [vmem:[%s3 + $0x98] sm:$0xff]
      %v357 = vld [vmem:[%s3 + $0xa0] sm:$0xff]
      %v358 = vld [vmem:[%s3 + $0xa8] sm:$0xff]
      %v359 = vld [vmem:[%s3 + $0xb0] sm:$0xff]
      %v360 = vld [vmem:[%s3 + $0xb8] sm:$0xff]
      %v361 = vld [vmem:[%s3 + $0xc0] sm:$0xff]
      %v362 = vld [vmem:[%s3 + $0xc8] sm:$0xff]
      %v363 = vld [vmem:[%s3 + $0xd0] sm:$0xff]
      %v364 = vld [vmem:[%s3 + $0xd8] sm:$0xff]
      %v365 = vld [vmem:[%s3 + $0xe0] sm:$0xff]
      %v366 = vld [vmem:[%s3 + $0xe8] sm:$0xff]
      %v367 = vld [vmem:[%s3 + $0xf0] sm:$0xff]
      %v368 = vld [vmem:[%s3 + $0xf8] sm:$0xff]
      %s369 = sld [smem:[#allocation2]]
      %v370 = vstv %s369
      %371 = vmatpush.msra.mxu0 %v352
      %372 = vmatpush.msra.mxu0 %v351
      %373 = vmatpush.msra.mxu0 %v350
      %374 = vmatpush.msra.mxu0 %v349
      %375 = vmatpush.msra.mxu0 %v348
      %376 = vmatpush.msra.mxu0 %v347
      %377 = vmatpush.msra.mxu0 %v346
      %378 = vmatpush.msra.mxu0 %v345
      %379 = vmatpush.msra.mxu0 %v344
      %380 = vmatpush.msra.mxu0 %v343
      %381 = vmatpush.msra.mxu0 %v342
      %382 = vmatpush.msra.mxu0 %v341
      %383 = vmatpush.msra.mxu0 %v340
      %384 = vmatpush.msra.mxu0 %v339
      %385 = vmatpush.msra.mxu0 %v338
      %386 = vmatpush.msra.mxu0 %v337
      %387 = vmatmul.f32.gmra.mxu0 %v329
      %v388 = vpop.f32.mrf.mxu0
      %v389 = vadd.f32 %v370, %v388
      %390 = vmatmul.f32.gmra.mxu0 %v331
      %v391 = vpop.f32.mrf.mxu0
      %v392 = vadd.f32 %v370, %v391
      %393 = vmatmul.f32.gmra.mxu0 %v333
      %v394 = vpop.f32.mrf.mxu0
      %v395 = vadd.f32 %v370, %v394
      %396 = vmatmul.f32.gmra.mxu0 %v335
      %v397 = vpop.f32.mrf.mxu0
      %v398 = vadd.f32 %v370, %v397
      %399 = vdwg.mxu0
      %400 = vmatpush.msra.mxu0 %v368
      %401 = vmatpush.msra.mxu0 %v367
      %402 = vmatpush.msra.mxu0 %v366
      %403 = vmatpush.msra.mxu0 %v365
      %404 = vmatpush.msra.mxu0 %v364
      %405 = vmatpush.msra.mxu0 %v363
      %406 = vmatpush.msra.mxu0 %v362
      %407 = vmatpush.msra.mxu0 %v361
      %408 = vmatpush.msra.mxu0 %v360
      %409 = vmatpush.msra.mxu0 %v359
      %410 = vmatpush.msra.mxu0 %v358
      %411 = vmatpush.msra.mxu0 %v357
      %412 = vmatpush.msra.mxu0 %v356
      %413 = vmatpush.msra.mxu0 %v355
      %414 = vmatpush.msra.mxu0 %v354
      %415 = vmatpush.msra.mxu0 %v353
      %416 = vmatmul.f32.gmra.mxu0 %v330
      %v417 = vpop.f32.mrf.mxu0
      %v418 = vadd.f32 %v389, %v417
      %419 = vmatmul.f32.gmra.mxu0 %v332
      %v420 = vpop.f32.mrf.mxu0
      %v421 = vadd.f32 %v392, %v420
      %422 = vmatmul.f32.gmra.mxu0 %v334
      %v423 = vpop.f32.mrf.mxu0
      %v424 = vadd.f32 %v395, %v423
      %425 = vmatmul.f32.gmra.mxu0 %v336
      %v426 = vpop.f32.mrf.mxu0
      %v427 = vadd.f32 %v398, %v426
      %428 = vdwg.mxu0
      %v429 = vxor.u32 %v418, 2147483648
      %v430 = vxor.u32 %v421, 2147483648
      %v431 = vxor.u32 %v424, 2147483648
      %v432 = vxor.u32 %v427, 2147483648
      %v433 = vmul.f32 %v429, 1.442695
      %v434 = vpow.pop %v433
      %v435 = vmul.f32 %v430, 1.442695
      %v436 = vpow.pop %v435
      %v437 = vmul.f32 %v431, 1.442695
      %v438 = vpow.pop %v437
      %v439 = vmul.f32 %v432, 1.442695
      %v440 = vpow.pop %v439
      %v441 = vadd.f32 %v434, 1.0
      %v442 = vadd.f32 %v436, 1.0
      %v443 = vadd.f32 %v438, 1.0
      %v444 = vadd.f32 %v440, 1.0
      %v445 = vrcp.pop %v441
      %v446 = vmul.f32 %v441, %v445
      %v447 = vsub.f32 1.0, %v446
      %v448 = vmul.f32 %v445, %v447
      %v449 = vadd.f32 %v445, %v448
      %vm450 = vweird.f32 %v441
      %vm451 = vweird.f32 %v445
      %vm452 = vmor %vm450, %vm451
      %v453 = vsel %vm452, %v445, %v449
      %v454 = vand.u32 2147483647, %v441
      %vm455 = vcmp.eq.f32.partialorder %v454, 8.507059e+37
      %v456 = vand.u32 %v441, 2147483648
      %v457 = vor.u32 1.1754944e-38, %v456
      %v458 = vsel %vm455, %v457, %v453
      %v459 = vmul.f32 1.0, %v458
      %v460 = vrcp.pop %v442
      %v461 = vmul.f32 %v442, %v460
      %v462 = vsub.f32 1.0, %v461
      %v463 = vmul.f32 %v460, %v462
      %v464 = vadd.f32 %v460, %v463
      %vm465 = vweird.f32 %v442
      %vm466 = vweird.f32 %v460
      %vm467 = vmor %vm465, %vm466
      %v468 = vsel %vm467, %v460, %v464
      %v469 = vand.u32 2147483647, %v442
      %vm470 = vcmp.eq.f32.partialorder %v469, 8.507059e+37
      %v471 = vand.u32 %v442, 2147483648
      %v472 = vor.u32 1.1754944e-38, %v471
      %v473 = vsel %vm470, %v472, %v468
      %v474 = vmul.f32 1.0, %v473
      %v475 = vrcp.pop %v443
      %v476 = vmul.f32 %v443, %v475
      %v477 = vsub.f32 1.0, %v476
      %v478 = vmul.f32 %v475, %v477
      %v479 = vadd.f32 %v475, %v478
      %vm480 = vweird.f32 %v443
      %vm481 = vweird.f32 %v475
      %vm482 = vmor %vm480, %vm481
      %v483 = vsel %vm482, %v475, %v479
      %v484 = vand.u32 2147483647, %v443
      %vm485 = vcmp.eq.f32.partialorder %v484, 8.507059e+37
      %v486 = vand.u32 %v443, 2147483648
      %v487 = vor.u32 1.1754944e-38, %v486
      %v488 = vsel %vm485, %v487, %v483
      %v489 = vmul.f32 1.0, %v488
      %v490 = vrcp.pop %v444
      %v491 = vmul.f32 %v444, %v490
      %v492 = vsub.f32 1.0, %v491
      %v493 = vmul.f32 %v490, %v492
      %v494 = vadd.f32 %v490, %v493
      %vm495 = vweird.f32 %v444
      %vm496 = vweird.f32 %v490
      %vm497 = vmor %vm495, %vm496
      %v498 = vsel %vm497, %v490, %v494
      %v499 = vand.u32 2147483647, %v444
      %vm500 = vcmp.eq.f32.partialorder %v499, 8.507059e+37
      %v501 = vand.u32 %v444, 2147483648
      %v502 = vor.u32 1.1754944e-38, %v501
      %v503 = vsel %vm500, %v502, %v498
      %v504 = vmul.f32 1.0, %v503
      %vm505 = vcmask 64512
      %506 = vst.msk [vmem:[%s227] sm:$0xff] %vm505, %v459
      %507 = vst.msk [vmem:[%s227 + $0x8] sm:$0xff] %vm505, %v474
      %508 = vst.msk [vmem:[%s227 + $0x10] sm:$0xff] %vm505, %v489
      %509 = vst.msk [vmem:[%s227 + $0x18] sm:$0xff] %vm505, %v504
      %s510 = smul.u32 4, %s17
      %p511 = scmp.lt.s32.totalorder %s510, 15
      %s512 = scalar_select %p511, %s510, 15
      %s513 = smul.addr %s512, 8
      %s514 = scalar_lea.vmem %s5, %s513
      // Predicated region
      $region41: #{simple_vae_top.1} parent=39 // pred_check
        %p515 = pneg %p145
      $region42: #{simple_vae_top.1} parent=39 // pred_check_branch
        %517 = sbr.rel (%p515) target = $region44
      $region43: #{simple_vae_top.1} parent=39 // pred_region
        %s518 = smul.u32 4, %s17
      $region44: #{simple_vae_top.1} parent=39 // pred_fallthru
        _
    $region40: #{simple_vae_top.1} parent=5 // pred_fallthru
      _
    %p519 = scmp.le.s32.totalorder 2, %s12
    // Predicated region
    $region45: #{simple_vae_top.1} parent=5 // pred_check
      %p520 = pneg %p519
    $region46: #{simple_vae_top.1} parent=5 // pred_check_branch
      %522 = sbr.rel (%p520) target = $region48
    $region47: #{simple_vae_top.1} parent=5 // pred_region
      %s523 = ssub.s32 %s12, 2
      // Predicated region
      $region49: #{simple_vae_top.1} parent=47 // pred_check
        %p524 = pneg %p151
      $region50: #{simple_vae_top.1} parent=47 // pred_check_branch
        %526 = sbr.rel (%p524) target = $region52
      $region51: #{simple_vae_top.1} parent=47 // pred_region
        %s527 = smul.u32 4, %s18
        %p528 = scmp.lt.s32.totalorder %s527, 15
        %s529 = scalar_select %p528, %s527, 15
        %s530 = smul.addr %s529, 8
        %s531 = scalar_lea.vmem %s5, %s530
      $region52: #{simple_vae_top.1} parent=47 // pred_fallthru
        _
    $region48: #{simple_vae_top.1} parent=5 // pred_fallthru
      _
  $region6: #{simple_vae_top.1} parent=0 // loop_footer
    %s16 = sadd.s32 1, %s12
  $region7: #{simple_vae_top.1} parent=0 // loop_footer_branch
    %11 = sbr.rel target = $region3
  $region8: #{simple_vae_top.1} parent=0 // loop_exit
    _

</llo_original>
